<compile_context>
chip_gen: v6e
topology: v6e:2x2x1
jax: 0.10.0
libtpu: 0.0.40
codegen_flags: <defaults>
</compile_context>

<pallas_src>
import functools

import jax
import jax.numpy as jnp
from jax.experimental import pallas as pl
from jax.experimental.pallas import tpu as pltpu


def _layernorm_kernel(x_ref, ab_ref, o_ref, *, eps, features):
    # x_ref: (tile_rows, F) in VMEM; ab_ref: (2, F) fused params (a_2, b_2).
    x = x_ref[...].astype(jnp.float32)

    # Two-pass statistics: mean first, then sum of squared deviations.  `diff`
    # is needed for the output anyway, so this adds no live data and avoids the
    # catastrophic cancellation of one-pass sum/sumsq when |mean| >> std.
    mean = jnp.sum(x, axis=-1, keepdims=True) * jnp.float32(1.0 / features)
    diff = x - mean
    var = jnp.sum(diff * diff, axis=-1, keepdims=True) * jnp.float32(
        1.0 / (features - 1))                      # unbiased, matches torch.std
    denom = jnp.sqrt(var) + jnp.float32(eps)       # eps added to STD (module spec)

    # EUP approximate reciprocal + one Newton-Raphson step: uses the otherwise
    # idle EUP slot instead of a VPU divide, and the refinement restores ~f32
    # accuracy.  Only (tile_rows, 1) values, so it is negligible either way.
    r = pl.reciprocal(denom, approx=True)
    inv = r * (jnp.float32(2.0) - denom * r)

    a = ab_ref[0:1, :].astype(jnp.float32)         # (1, F) -> broadcast over rows
    b = ab_ref[1:2, :].astype(jnp.float32)
    o_ref[...] = (diff * inv * a + b).astype(o_ref.dtype)


def _sublane_pack(itemsize):
    # Native sublane packing: 8 rows for 32-bit, 16 for 16-bit, 32 for 8-bit.
    return {4: 8, 2: 16, 1: 32}.get(itemsize, 8)


def _vmem_capacity_bytes():
    try:
        return int(pltpu.get_tpu_info().vmem_capacity_bytes)
    except Exception:
        # Conservative fallback = v7x per-TensorCore VMEM.
        return 64 * 1024 * 1024


def _choose_tile_rows(rows, features, itemsize, pack, vmem_cap):
    # Per-row footprint: 2x input + 2x output buffers (double-buffered, native
    # dtype) plus ~3 f32 temporaries (x_f32 / diff / y) of internal scratch.
    per_row = features * (4 * itemsize + 12)
    # Modest budget: beyond ~512-row tiles the HBM-roofline fraction is flat,
    # so spend VMEM savings on pipeline depth (more grid steps) instead.
    budget = min(vmem_cap // 4, 24 * 1024 * 1024)
    t = budget // max(per_row, 1)
    t = max(pack, min(int(t), 512))
    t = (t // pack) * pack

    # Guarantee multiple grid steps when there is enough work:
    #   * >= 8 steps for large inputs (amortizes pipeline fill/drain that is
    #     not overlapped), without shrinking tiles below 64 rows;
    #   * >= 2 steps whenever rows allow, so v7x's two TensorCores both get
    #     work from the "parallel" grid axis (grid=1 leaves one core idle).
    if rows >= 8 * 64:
        t = min(t, max(64, (rows // 8 // pack) * pack))
    elif rows >= 2 * pack:
        t = min(t, max(pack, (rows // 2 // pack) * pack))

    # Never (much) larger than the row count itself.
    t = min(t, pl.cdiv(rows, pack) * pack)
    return max(t, pack), per_row


def layer_norm(x, a_2, b_2, eps=1e-6, tile_rows=None):
    """x: (..., features); a_2, b_2: (features,). LayerNorm over the last axis."""
    orig_shape = x.shape
    features = orig_shape[-1]
    assert features > 1, "unbiased std needs features > 1"

    rows = 1
    for d in orig_shape[:-1]:
        rows *= d
    x2 = x.reshape(rows, features)

    itemsize = jnp.dtype(x.dtype).itemsize
    pack = _sublane_pack(itemsize)
    vmem_cap = _vmem_capacity_bytes()

    if tile_rows is None:
        tile_rows, per_row = _choose_tile_rows(rows, features, itemsize, pack, vmem_cap)
    else:
        tile_rows = max(pack, (tile_rows // pack) * pack)
        per_row = features * (4 * itemsize + 12)

    # a_2 / b_2 fused into one (2, F) stream: a single extra resident DMA.
    ab = jnp.stack([a_2, b_2], axis=0)
    ab_itemsize = jnp.dtype(ab.dtype).itemsize

    # No row padding and no feature padding: Pallas clips the trailing partial
    # row block (per-row stats make the garbage rows harmless, and they are
    # never written back), and the last block dim equals the array dim so any
    # features % 128 remainder is handled by masked stores instead of HBM pads.
    grid = (pl.cdiv(rows, tile_rows),)

    # Scoped VMEM: ~1.25x the real double-buffered footprint (per_row already
    # counts both buffer copies plus f32 temporaries), clamped to 85% of
    # physical VMEM so Mosaic keeps headroom for its internal scratch.
    need = tile_rows * per_row + 2 * 2 * features * ab_itemsize
    vmem_limit = int(min(int(0.85 * vmem_cap),
                         max(32 * 1024 * 1024, int(1.25 * need) + (2 << 20))))

    # Advisory cost for XLA's scheduler: ~8 flops/elem, 2 transcendentals/row
    # (sqrt + reciprocal), HBM traffic = read x + write out + params.
    cost = pl.CostEstimate(
        flops=8 * rows * features,
        transcendentals=2 * rows,
        bytes_accessed=2 * rows * features * itemsize + 2 * features * ab_itemsize,
    )

    kernel = functools.partial(_layernorm_kernel, eps=eps, features=features)

    out = pl.pallas_call(
        kernel,
        out_shape=jax.ShapeDtypeStruct((rows, features), x.dtype),
        grid_spec=pltpu.PrefetchScalarGridSpec(
            num_scalar_prefetch=0,
            grid=grid,
            in_specs=[
                pl.BlockSpec((tile_rows, features), lambda i: (i, 0)),
                pl.BlockSpec((2, features), lambda i: (0, 0)),
            ],
            out_specs=pl.BlockSpec((tile_rows, features), lambda i: (i, 0)),
        ),
        compiler_params=pltpu.CompilerParams(
            dimension_semantics=("parallel",),   # lets v7x shard rows across 2 TCs
            vmem_limit_bytes=vmem_limit,
        ),
        cost_estimate=cost,
    )(x2, ab)

    return out.reshape(orig_shape)


def _reference_layer_norm(x, a_2, b_2, eps=1e-6):
    # Pure-JAX reference matching torch semantics (unbiased std, eps on std).
    x32 = x.astype(jnp.float32)
    mean = jnp.mean(x32, axis=-1, keepdims=True)
    var = jnp.sum((x32 - mean) ** 2, axis=-1, keepdims=True) / (x.shape[-1] - 1)
    std = jnp.sqrt(var)
    return (a_2 * (x32 - mean) / (std + eps) + b_2).astype(x.dtype)


if __name__ == "__main__":
    key = jax.random.PRNGKey(0)
    batch, seq, hidden = 2, 8, 32

    x = jax.random.normal(key, (batch, seq, hidden), dtype=jnp.float32)
    # Deterministic parameter init per nn.Module __init__: ones / zeros.
    a_2 = jnp.ones((hidden,), dtype=jnp.float32)
    b_2 = jnp.zeros((hidden,), dtype=jnp.float32)

    out = layer_norm(x, a_2, b_2, eps=1e-6)
    out = jax.block_until_ready(out)

    ref = _reference_layer_norm(x, a_2, b_2, eps=1e-6)
    assert out.shape == x.shape
    assert jnp.allclose(out, ref, atol=1e-4, rtol=1e-4), "mismatch vs reference"

    print("KERNEL_OK")
</pallas_src>

<mosaic_0001>
module attributes {stable_mosaic.version = 11 : i64} {
  func.func @_layernorm_kernel(%arg0: i32, %arg1: memref<8x32xf32, #tpu.memory_space<vmem>>, %arg2: memref<2x32xf32, #tpu.memory_space<vmem>>, %arg3: memref<8x32xf32, #tpu.memory_space<vmem>>) attributes {dimension_semantics = [#tpu.dimension_semantics<parallel>], iteration_bounds = array<i64: 2>, scalar_prefetch = 0 : i64, scratch_operands = 0 : i64, tpu.core_type = #tpu.core_type<tc>, window_params = [{transform_indices = @transform_0, window_bounds = array<i64: 8, 32>}, {pipeline_mode = #tpu.pipeline_mode<synchronous>, transform_indices = @transform_1, window_bounds = array<i64: 2, 32>}, {transform_indices = @transform_2, window_bounds = array<i64: 8, 32>}]} {
    %c0 = arith.constant 0 : index
    %c0_0 = arith.constant 0 : index
    %0 = vector.load %arg1[%c0, %c0_0] : memref<8x32xf32, #tpu.memory_space<vmem>>, vector<8x32xf32>
    %cst = arith.constant dense<0.000000e+00> : vector<8xf32>
    %1 = vector.multi_reduction <add>, %0, %cst [1] : vector<8x32xf32> to vector<8xf32>
    %2 = vector.shape_cast %1 : vector<8xf32> to vector<8x1xf32>
    %cst_1 = arith.constant 3.125000e-02 : f32
    %3 = vector.broadcast %cst_1 : f32 to vector<8x1xf32>
    %4 = arith.mulf %2, %3 : vector<8x1xf32>
    %5 = vector.broadcast %4 : vector<8x1xf32> to vector<8x32xf32>
    %6 = arith.subf %0, %5 : vector<8x32xf32>
    %7 = arith.mulf %6, %6 : vector<8x32xf32>
    %cst_2 = arith.constant dense<0.000000e+00> : vector<8xf32>
    %8 = vector.multi_reduction <add>, %7, %cst_2 [1] : vector<8x32xf32> to vector<8xf32>
    %9 = vector.shape_cast %8 : vector<8xf32> to vector<8x1xf32>
    %cst_3 = arith.constant 0.0322580636 : f32
    %10 = vector.broadcast %cst_3 : f32 to vector<8x1xf32>
    %11 = arith.mulf %9, %10 : vector<8x1xf32>
    %12 = math.sqrt %11 : vector<8x1xf32>
    %cst_4 = arith.constant 9.99999997E-7 : f32
    %13 = vector.broadcast %cst_4 : f32 to vector<8x1xf32>
    %14 = arith.addf %12, %13 : vector<8x1xf32>
    %15 = tpu.reciprocal %14 {approx = true} : vector<8x1xf32> -> vector<8x1xf32>
    %16 = arith.mulf %14, %15 : vector<8x1xf32>
    %cst_5 = arith.constant 2.000000e+00 : f32
    %17 = vector.broadcast %cst_5 : f32 to vector<8x1xf32>
    %18 = arith.subf %17, %16 : vector<8x1xf32>
    %19 = arith.mulf %15, %18 : vector<8x1xf32>
    %c0_6 = arith.constant 0 : index
    %c0_7 = arith.constant 0 : index
    %20 = vector.load %arg2[%c0_6, %c0_7] : memref<2x32xf32, #tpu.memory_space<vmem>>, vector<1x32xf32>
    %c1 = arith.constant 1 : index
    %c0_8 = arith.constant 0 : index
    %21 = vector.load %arg2[%c1, %c0_8] : memref<2x32xf32, #tpu.memory_space<vmem>>, vector<1x32xf32>
    %22 = vector.broadcast %19 : vector<8x1xf32> to vector<8x32xf32>
    %23 = arith.mulf %6, %22 : vector<8x32xf32>
    %24 = vector.broadcast %20 : vector<1x32xf32> to vector<8x32xf32>
    %25 = arith.mulf %23, %24 : vector<8x32xf32>
    %26 = vector.broadcast %21 : vector<1x32xf32> to vector<8x32xf32>
    %27 = arith.addf %25, %26 : vector<8x32xf32>
    %c0_9 = arith.constant 0 : index
    %c0_10 = arith.constant 0 : index
    %28 = vector.load %arg3[%c0_9, %c0_10] : memref<8x32xf32, #tpu.memory_space<vmem>>, vector<8x32xf32>
    tpu.vector_store %arg3[%c0_9, %c0_10], %27 {strides = array<i32>} : memref<8x32xf32, #tpu.memory_space<vmem>>, vector<8x32xf32>,
    return
  }
  func.func @transform_0(%arg0: i32) -> (i32, i32) {
    %c0_i32 = arith.constant 0 : i32
    %c0_i32_0 = arith.constant 0 : i32
    return %arg0, %c0_i32 : i32, i32
  }
  func.func @transform_1(%arg0: i32) -> (i32, i32) {
    %c0_i32 = arith.constant 0 : i32
    %c0_i32_0 = arith.constant 0 : i32
    %c0_i32_1 = arith.constant 0 : i32
    return %c0_i32, %c0_i32_0 : i32, i32
  }
  func.func @transform_2(%arg0: i32) -> (i32, i32) {
    %c0_i32 = arith.constant 0 : i32
    %c0_i32_0 = arith.constant 0 : i32
    return %arg0, %c0_i32 : i32, i32
  }
}

</mosaic_0001>

<llo_original>
// kernel: tpu_custom_call.1
$region0: #{tpu_custom_call.1}
  #allocation0 [shape = 'u32[]', space=smem, size = 0x4, offset = 0x4, fixed_abs, tag = 'smem constant byte address 0x4 - core index']
  #allocation1 [shape = 'u32[144,128]{1,0:T(1,128)}', space=vmem, size = 0x12000, scoped, tag = 'internal scratch']
  %s0 = inlined_call_operand.hbm [shape: f32[16,32], index: 0, kind: input, shape index: {}]
  %s1 = inlined_call_operand.hbm [shape: f32[2,32], index: 1, kind: input, shape index: {}]
  %s2 = inlined_call_operand.hbm [shape: f32[16,32], index: 2, kind: output, shape index: {}]
  %s3 = sld [smem:[#allocation0]]
  $region49: #{tpu_custom_call.1} parent=0
    _
  %s5 = ssub.s32 1, %s3
  %s6 = scalar_select 0, %s5, %s3
  $region1: #{tpu_custom_call.1} parent=0
    #allocation2 [shape = 'u8[8192]{0}', space=vmem, size = 0x2000, scoped, tag = 'input window, operand 0']
    #allocation3 [shape = 's32[2]{0}', space=sflag, size = 0x8, scoped, tag = 'scoped memory for tpu_custom_call.1']
    #allocation4 [shape = 's32[2]{0}', space=sflag, size = 0x8, scoped, tag = 'scoped memory for tpu_custom_call.1']
    #allocation5 [shape = 'u8[1024]{0}', space=vmem, size = 0x400, scoped, tag = 'input window, operand 1, single buffered']
    #allocation6 [shape = 's32[1]{0}', space=sflag, size = 0x4, scoped, tag = 'scoped memory for tpu_custom_call.1']
    #allocation7 [shape = 'u8[8192]{0}', space=vmem, size = 0x2000, scoped, tag = 'output window, operand 0']
    %7 = vsyncpa [#allocation3], 0
    %s8 = scalar_lea.sflag [#allocation3], 1
    %9 = vsyncpa %s8, 0
    %10 = vsyncpa [#allocation6], 0
    %11 = vsyncpa [#allocation4], 0
    %s12 = scalar_lea.sflag [#allocation4], 1
    %13 = vsyncpa %s12, 0
    loop: start=0, step=1, limit=4
    $region2: #{tpu_custom_call.1} parent=1 // loop_pre_header
      _
    $region3: #{tpu_custom_call.1} parent=1 // loop_header
      %s15 = sphi 0, %s19
      %p16 = scmp.ge.s32.totalorder %s15, 4
      %s25 = sphi 0, %s27
      %s28 = sphi 0, %s25
      %s29 = sphi 0, %s28
      %s45 = sphi 0, %s29
      %s49 = sphi 0, %s49
      %s51 = sphi 0, %s49
      %s52 = sphi 0, %s51
      %s66 = sphi 0, %s52
      %s72 = sphi 0, %s74
      %s75 = sphi 0, %s72
      %s76 = sphi 0, %s75
      %s92 = sphi 0, %s76
    $region4: #{tpu_custom_call.1} parent=1 // loop_header_branch
      %18 = sbr.rel (%p16) target = $region8
    $region5: #{tpu_custom_call.1} parent=1 // loop_body
      %s20 = ssub.s32 %s15, 1
      %s21 = ssub.s32 %s15, 2
      %s22 = sadd.s32 %s15, 1
      %s23 = ssub.s32 %s15, %s22
      %p24 = scmp.eq.s32.totalorder %s23, 0
      %s26 = sadd.s32 %s25, 1
      %s27 = scalar_select %p24, %s25, %s26
      %p30 = pneg %p24
      %p31 = scmp.eq.s32.totalorder %s15, 1
      %p32 = por %p30, %p31
      %p33 = scmp.ne.s32.totalorder %s25, %s28
      %p34 = scmp.eq.s32.totalorder %s15, 0
      %p35 = por %p33, %p34
      %p36 = scmp.ne.s32.totalorder %s25, %s28
      %p37 = scmp.eq.s32.totalorder %s20, 1
      %p38 = por %p36, %p37
      %p39 = scmp.ne.s32.totalorder %s28, %s29
      %p40 = scmp.eq.s32.totalorder %s20, 0
      %p41 = por %p39, %p40
      %p42 = scmp.ne.s32.totalorder %s28, %s29
      %p43 = scmp.eq.s32.totalorder %s21, 1
      %p44 = por %p42, %p43
      %p46 = scmp.ne.s32.totalorder %s29, %s45
      %p47 = scmp.eq.s32.totalorder %s21, 0
      %p48 = por %p46, %p47
      %s50 = sadd.s32 %s49, 1
      %p53 = scmp.eq.s32.totalorder %s15, 1
      %p54 = scmp.ne.s32.totalorder %s49, %s51
      %p55 = scmp.eq.s32.totalorder %s15, 0
      %p56 = por %p54, %p55
      %p57 = scmp.ne.s32.totalorder %s49, %s51
      %p58 = scmp.eq.s32.totalorder %s20, 1
      %p59 = por %p57, %p58
      %p60 = scmp.ne.s32.totalorder %s51, %s52
      %p61 = scmp.eq.s32.totalorder %s20, 0
      %p62 = por %p60, %p61
      %p63 = scmp.ne.s32.totalorder %s51, %s52
      %p64 = scmp.eq.s32.totalorder %s21, 1
      %p65 = por %p63, %p64
      %p67 = scmp.ne.s32.totalorder %s52, %s66
      %p68 = scmp.eq.s32.totalorder %s21, 0
      %p69 = por %p67, %p68
      %s70 = ssub.s32 %s15, %s22
      %p71 = scmp.eq.s32.totalorder %s70, 0
      %s73 = sadd.s32 %s72, 1
      %s74 = scalar_select %p71, %s72, %s73
      %p77 = pneg %p71
      %p78 = scmp.eq.s32.totalorder %s15, 1
      %p79 = por %p77, %p78
      %p80 = scmp.ne.s32.totalorder %s72, %s75
      %p81 = scmp.eq.s32.totalorder %s15, 0
      %p82 = por %p80, %p81
      %p83 = scmp.ne.s32.totalorder %s72, %s75
      %p84 = scmp.eq.s32.totalorder %s20, 1
      %p85 = por %p83, %p84
      %p86 = scmp.ne.s32.totalorder %s75, %s76
      %p87 = scmp.eq.s32.totalorder %s20, 0
      %p88 = por %p86, %p87
      %p89 = scmp.ne.s32.totalorder %s75, %s76
      %p90 = scmp.eq.s32.totalorder %s21, 1
      %p91 = por %p89, %p90
      %p93 = scmp.ne.s32.totalorder %s76, %s92
      %p94 = scmp.eq.s32.totalorder %s21, 0
      %p95 = por %p93, %p94
      %p96 = scmp.le.s32.totalorder 1, %s15
      %p97 = scmp.lt.s32.totalorder %s15, 3
      %p98 = pnand %p96, %p97
      %p99 = pneg %p98
      // Predicated region
      $region9: #{tpu_custom_call.1} parent=5 // pred_check
        _
      $region10: #{tpu_custom_call.1} parent=5 // pred_check_branch
        %101 = sbr.rel (%p98) target = $region12
      $region11: #{tpu_custom_call.1} parent=5 // pred_region
        %s102 = ssub.s32 %s15, 1
        // Predicated region
        $region13: #{tpu_custom_call.1} parent=11 // pred_check
          %p103 = pneg %p62
        $region14: #{tpu_custom_call.1} parent=11 // pred_check_branch
          %105 = sbr.rel (%p103) target = $region16
        $region15: #{tpu_custom_call.1} parent=11 // pred_region
          %s107 = ssub.s32 32, 32
          %108 = vsyncadd [#allocation6], %s107
          %s110 = sshll.u32 [#allocation5], 4
          %s111 = int_to_ptr.vmem [resolvable:$true] %s110
          %113 = dma.hbm_to_vmem [thread:$0]  %s1, 32, %s111, [#allocation6]
        $region16: #{tpu_custom_call.1} parent=11 // pred_fallthru
          _
      $region12: #{tpu_custom_call.1} parent=5 // pred_fallthru
        _
      %p114 = scmp.lt.s32.totalorder %s15, 2
      // Predicated region
      $region17: #{tpu_custom_call.1} parent=5 // pred_check
        %p115 = pneg %p114
      $region18: #{tpu_custom_call.1} parent=5 // pred_check_branch
        %117 = sbr.rel (%p115) target = $region20
      $region19: #{tpu_custom_call.1} parent=5 // pred_region
        // Predicated region
        $region21: #{tpu_custom_call.1} parent=19 // pred_check
          %p118 = pneg %p35
        $region22: #{tpu_custom_call.1} parent=19 // pred_check_branch
          %120 = sbr.rel (%p118) target = $region24
        $region23: #{tpu_custom_call.1} parent=19 // pred_region
          %s121 = sand.u32 %s25, 1
          %s122 = scalar_lea.sflag [#allocation3], %s121
          %s123 = sand.u32 %s25, 1
          %s124 = smul.addr %s123, 8
          %s125 = scalar_lea.vmem [#allocation2], %s124
          %s127 = ssub.s32 128, 128
          %128 = vsyncadd %s122, %s127
          %s129 = smul.addr %s15, 128
          %s130 = scalar_lea.hbm %s0, %s129
          %s132 = sshll.u32 %s125, 4
          %s133 = int_to_ptr.vmem [resolvable:$true] %s132
          %135 = dma.hbm_to_vmem [thread:$0]  %s130, 128, %s133, %s122
        $region24: #{tpu_custom_call.1} parent=19 // pred_fallthru
          _
      $region20: #{tpu_custom_call.1} parent=5 // pred_fallthru
        _
      %p136 = scmp.le.s32.totalorder 1, %s15
      %p137 = scmp.lt.s32.totalorder %s15, 3
      %p138 = pnand %p136, %p137
      %p139 = pneg %p138
      // Predicated region
      $region25: #{tpu_custom_call.1} parent=5 // pred_check
        _
      $region26: #{tpu_custom_call.1} parent=5 // pred_check_branch
        %141 = sbr.rel (%p138) target = $region28
      $region27: #{tpu_custom_call.1} parent=5 // pred_region
        %s142 = ssub.s32 %s15, 1
        %s143 = sand.u32 %s28, 1
        %s144 = scalar_lea.sflag [#allocation3], %s143
        %s145 = sand.u32 %s28, 1
        %s146 = smul.addr %s145, 8
        %s147 = scalar_lea.vmem [#allocation2], %s146
        // Predicated region
        $region29: #{tpu_custom_call.1} parent=27 // pred_check
          %p148 = pneg %p41
        $region30: #{tpu_custom_call.1} parent=27 // pred_check_branch
          %150 = sbr.rel (%p148) target = $region32
        $region31: #{tpu_custom_call.1} parent=27 // pred_region
          %151 = dma.done %s144, 128
        $region32: #{tpu_custom_call.1} parent=27 // pred_fallthru
          _
        // Predicated region
        $region33: #{tpu_custom_call.1} parent=27 // pred_check
          %p152 = pneg %p62
        $region34: #{tpu_custom_call.1} parent=27 // pred_check_branch
          %154 = sbr.rel (%p152) target = $region36
        $region35: #{tpu_custom_call.1} parent=27 // pred_region
          %155 = dma.done [#allocation6], 32
        $region36: #{tpu_custom_call.1} parent=27 // pred_fallthru
          _
        %s156 = sand.u32 %s28, 1
        %s157 = scalar_lea.sflag [#allocation3], %s156
        %s158 = sand.u32 %s28, 1
        %s159 = smul.addr %s158, 8
        %s160 = scalar_lea.vmem [#allocation2], %s159
        %p161 = pneg %p41
        %p162 = pneg %p38
        %p163 = pneg %p62
        %p164 = pneg %p59
        %p165 = pneg %p88
        %p166 = pneg %p85
        %s167 = sand.u32 %s75, 1
        %s168 = scalar_lea.sflag [#allocation4], %s167
        %s169 = sand.u32 %s75, 1
        %s170 = smul.addr %s169, 8
        %s171 = scalar_lea.vmem [#allocation7], %s170
        %v172 = vld [vmem:[%s147] sm:$0xff]
        %vm173 = vcmask 261120
        %v174 = vsel %vm173, %v172, 0.0
        %175 = vadd.xlane.f32.xlu0 %v174
        %v176 = vpop.xlane.xlu0 %175
        %v177 = vmul.f32 %v176, 0.03125
        %v178 = vsub.f32 %v172, %v177
        %v179 = vmul.f32 %v178, %v178
        %v180 = vsel %vm173, %v179, 0.0
        %181 = vadd.xlane.f32.xlu0 %v180
        %v182 = vpop.xlane.xlu0 %181
        %v183 = vmul.f32 %v182, 0.032258064
        %v184 = vrsqrt.pop %v183
        %v185 = vmul.f32 %v183, %v184
        %vm186 = vcmp.eq.f32.partialorder %v183, inf
        %v187 = vsel %vm186, %v183, %v185
        %vm188 = vcmp.eq.f32.partialorder %v183, 0.0
        %v189 = vand.u32 %v183, 2147483648
        %v190 = vsel %vm188, %v189, %v187
        %v191 = vadd.f32 %v190, 1e-06
        %v192 = vrcp.pop %v191
        %v193 = vmul.f32 %v191, %v192
        %v194 = vsub.f32 2.0, %v193
        %v195 = vmul.f32 %v192, %v194
        %v196 = vld [vmem:[#allocation5] sm:$0x1]
        %v197 = vld [vmem:[#allocation5 + $0x1] sm:$0x1]
        %v198 = vmul.f32 %v178, %v195
        %v199 = vlaneseq
        %v200 = vshrl.u32 %v199, 7
        %v201 = vsub.s32 0, %v200
        %v202 = vrot.slane %v196, %v201
        %v203 = vmul.f32 %v198, %v202
        %v204 = vlaneseq
        %v205 = vshrl.u32 %v204, 7
        %v206 = vsub.s32 0, %v205
        %v207 = vrot.slane %v197, %v206
        %v208 = vadd.f32 %v203, %v207
        %209 = vst.msk [vmem:[%s171] sm:$0xff] %vm173, %v208
        %s210 = sand.u32 %s75, 1
        %s211 = scalar_lea.sflag [#allocation4], %s210
        %s212 = sand.u32 %s75, 1
        %s213 = smul.addr %s212, 8
        %s214 = scalar_lea.vmem [#allocation7], %s213
        // Predicated region
        $region37: #{tpu_custom_call.1} parent=27 // pred_check
          %p215 = pneg %p85
        $region38: #{tpu_custom_call.1} parent=27 // pred_check_branch
          %217 = sbr.rel (%p215) target = $region40
        $region39: #{tpu_custom_call.1} parent=27 // pred_region
          %s219 = ssub.s32 128, 128
          %220 = vsyncadd %s211, %s219
          %s221 = smul.addr %s20, 128
          %s222 = scalar_lea.hbm %s2, %s221
          %s224 = sshll.u32 %s214, 4
          %s225 = int_to_ptr.vmem [resolvable:$true] %s224
          %227 = dma.vmem_to_hbm [thread:$0]  %s225, 128, %s222, %s211
        $region40: #{tpu_custom_call.1} parent=27 // pred_fallthru
          _
      $region28: #{tpu_custom_call.1} parent=5 // pred_fallthru
        _
      %p228 = scmp.le.s32.totalorder 2, %s15
      // Predicated region
      $region41: #{tpu_custom_call.1} parent=5 // pred_check
        %p229 = pneg %p228
      $region42: #{tpu_custom_call.1} parent=5 // pred_check_branch
        %231 = sbr.rel (%p229) target = $region44
      $region43: #{tpu_custom_call.1} parent=5 // pred_region
        %s232 = ssub.s32 %s15, 2
        // Predicated region
        $region45: #{tpu_custom_call.1} parent=43 // pred_check
          %p233 = pneg %p91
        $region46: #{tpu_custom_call.1} parent=43 // pred_check_branch
          %235 = sbr.rel (%p233) target = $region48
        $region47: #{tpu_custom_call.1} parent=43 // pred_region
          %s236 = sand.u32 %s76, 1
          %s237 = scalar_lea.sflag [#allocation4], %s236
          %s238 = sand.u32 %s76, 1
          %s239 = smul.addr %s238, 8
          %s240 = scalar_lea.vmem [#allocation7], %s239
          %241 = dma.done %s237, 128
        $region48: #{tpu_custom_call.1} parent=43 // pred_fallthru
          _
      $region44: #{tpu_custom_call.1} parent=5 // pred_fallthru
        _
    $region6: #{tpu_custom_call.1} parent=1 // loop_footer
      %s19 = sadd.s32 1, %s15
    $region7: #{tpu_custom_call.1} parent=1 // loop_footer_branch
      %14 = sbr.rel target = $region3
    $region8: #{tpu_custom_call.1} parent=1 // loop_exit
      _
    %242 = vsyncpa [#allocation3], 1
    %s243 = scalar_lea.sflag [#allocation3], 1
    %244 = vsyncpa %s243, 1
    %245 = vsyncpa [#allocation6], 1
    %246 = vsyncpa [#allocation4], 1
    %s247 = scalar_lea.sflag [#allocation4], 1
    %248 = vsyncpa %s247, 1

</llo_original>
